<compile_context>
chip_gen: v5e
topology: v5e:2x2
jax: 0.10.0
libtpu: 0.0.40
codegen_flags: <defaults>
</compile_context>

<pallas_src>
import functools

import jax
import jax.numpy as jnp
from jax.experimental import pallas as pl
from jax.experimental.pallas import tpu as pltpu


def _round_up(x, m):
    return ((x + m - 1) // m) * m


def _edge_passing_kernel(x_ref, w_ref, b_ref, o_ref):
    # x_ref: (te, in_dim)      edge-major tile, streaming dtype (== x.dtype)
    # w_ref: (in_dim, out_dim) BN-folded Linear weight, transposed, resident
    # b_ref: (1, out_dim)      BN-folded bias, f32, resident
    # o_ref: (te, out_dim)     edge-major output tile, dtype == x.dtype
    h = jnp.dot(x_ref[...], w_ref[...], preferred_element_type=jnp.float32)
    h = h + b_ref[...]                     # per-channel bias, lane broadcast
    o_ref[...] = jnp.maximum(h, 0.0).astype(o_ref.dtype)


@functools.partial(jax.jit, static_argnames=("eps", "tile_e"))
def edge_passing_forward(x, w, b, gamma, beta, running_mean, running_var,
                         *, eps=1e-5, tile_e=8192):
    """EdgePassing forward: relu(batchnorm(linear(x))) applied per edge.

    x: (E, in_dim) source-node features gathered per edge (f32 or bf16).
    w: (out_dim, in_dim), b: (out_dim,)                  -- nn.Linear (PyTorch).
    gamma, beta, running_mean, running_var: (out_dim,)   -- BatchNorm1d (eval).
    Returns (E, out_dim) in x.dtype.
    """
    E, in_dim = x.shape
    out_dim = w.shape[0]

    if E == 0:                                     # guard empty edge set
        return jnp.zeros((0, out_dim), x.dtype)

    # --- fold eval-mode BatchNorm1d into the Linear (exact affine fold) ------
    s = gamma.astype(jnp.float32) * jax.lax.rsqrt(
        running_var.astype(jnp.float32) + eps)                        # (out,)
    w_eff_t = (w.astype(jnp.float32) * s[:, None]).T.astype(x.dtype)  # (in, out)
    b_eff = (s * (b.astype(jnp.float32) - running_mean.astype(jnp.float32))
             + beta.astype(jnp.float32))[None, :]                     # (1, out) f32

    # --- edge tile (sublane axis): big to amortize per-step overhead, but ----
    # --- capped so grid_e >= 2 (keeps both v7x TensorCores busy) -------------
    te = max(128, int(tile_e))
    te = min(te, _round_up(pl.cdiv(E, 2), 128))
    te = _round_up(te, 128)
    grid_e = pl.cdiv(E, te)        # last block may be partial; Pallas masks it

    itemsize = x.dtype.itemsize
    cost = pl.CostEstimate(
        flops=2 * E * in_dim * out_dim,
        transcendentals=0,
        bytes_accessed=(E * (in_dim + out_dim) * itemsize
                        + in_dim * out_dim * itemsize + out_dim * 4),
    )

    return pl.pallas_call(
        _edge_passing_kernel,
        out_shape=jax.ShapeDtypeStruct((E, out_dim), x.dtype),
        grid_spec=pltpu.PrefetchScalarGridSpec(
            num_scalar_prefetch=0,
            grid=(grid_e,),
            in_specs=[
                pl.BlockSpec((te, in_dim), lambda i: (i, 0)),       # x tile (streamed)
                pl.BlockSpec((in_dim, out_dim), lambda i: (0, 0)),  # W_eff^T (resident)
                pl.BlockSpec((1, out_dim), lambda i: (0, 0)),       # b_eff   (resident)
            ],
            out_specs=pl.BlockSpec((te, out_dim), lambda i: (i, 0)),  # edge-major out
        ),
        compiler_params=pltpu.CompilerParams(
            dimension_semantics=("parallel",),
            vmem_limit_bytes=48 * 1024 * 1024,   # <= v7x 64 MiB; ample on v5e/v6e
        ),
        cost_estimate=cost,
    )(x, w_eff_t, b_eff)


def _reference(x, w, b, gamma, beta, mean, var, eps=1e-5):
    h = x @ w.T + b
    h = (h - mean) / jnp.sqrt(var + eps) * gamma + beta
    return jnp.maximum(h, 0.0)


if __name__ == "__main__":
    # Small shapes consistent with the module: E edges, in_dim -> out_dim MLP.
    # E deliberately not a multiple of 128 to exercise the partial-block path.
    E, in_dim, out_dim = 300, 32, 64

    key = jax.random.PRNGKey(0)
    kx, kw, kb, kg, kbe, km, kv = jax.random.split(key, 7)

    x = jax.random.normal(kx, (E, in_dim), jnp.float32)

    lim = 1.0 / jnp.sqrt(in_dim)
    w = jax.random.uniform(kw, (out_dim, in_dim), jnp.float32, -lim, lim)
    b = jax.random.uniform(kb, (out_dim,), jnp.float32, -lim, lim)

    # BatchNorm1d (eval) parameters / running statistics, deterministic init.
    gamma = jax.random.uniform(kg, (out_dim,), jnp.float32, 0.5, 1.5)
    beta = 0.1 * jax.random.normal(kbe, (out_dim,), jnp.float32)
    running_mean = 0.1 * jax.random.normal(km, (out_dim,), jnp.float32)
    running_var = jax.random.uniform(kv, (out_dim,), jnp.float32, 0.5, 1.5)

    # --- f32 streaming path ---------------------------------------------------
    out = edge_passing_forward(x, w, b, gamma, beta, running_mean, running_var)
    out = jax.block_until_ready(out)
    ref = _reference(x, w, b, gamma, beta, running_mean, running_var)
    assert out.shape == (E, out_dim)
    assert out.dtype == x.dtype
    assert jnp.allclose(out, ref, atol=2e-3, rtol=2e-3), "f32 mismatch vs reference"

    # --- bf16 streaming path (halved HBM traffic, f32 accumulation) ------------
    x_bf = x.astype(jnp.bfloat16)
    out_bf = edge_passing_forward(x_bf, w, b, gamma, beta, running_mean, running_var)
    out_bf = jax.block_until_ready(out_bf)
    ref_bf = _reference(x_bf.astype(jnp.float32), w, b, gamma, beta,
                        running_mean, running_var)
    assert out_bf.shape == (E, out_dim)
    assert out_bf.dtype == jnp.bfloat16
    assert jnp.allclose(out_bf.astype(jnp.float32), ref_bf, atol=5e-2, rtol=5e-2), \
        "bf16 mismatch vs reference"

    print("KERNEL_OK")
</pallas_src>

<mosaic_0001>
module attributes {stable_mosaic.version = 11 : i64} {
  func.func @_edge_passing_kernel(%arg0: i32, %arg1: memref<256x32xf32, #tpu.memory_space<vmem>>, %arg2: memref<32x64xf32, #tpu.memory_space<vmem>>, %arg3: memref<1x64xf32, #tpu.memory_space<vmem>>, %arg4: memref<256x64xf32, #tpu.memory_space<vmem>>) attributes {dimension_semantics = [#tpu.dimension_semantics<parallel>], iteration_bounds = array<i64: 2>, scalar_prefetch = 0 : i64, scratch_operands = 0 : i64, tpu.core_type = #tpu.core_type<tc>, window_params = [{transform_indices = @transform_0, window_bounds = array<i64: 256, 32>}, {pipeline_mode = #tpu.pipeline_mode<synchronous>, transform_indices = @transform_1, window_bounds = array<i64: 32, 64>}, {pipeline_mode = #tpu.pipeline_mode<synchronous>, transform_indices = @transform_2, window_bounds = array<i64: 1, 64>}, {transform_indices = @transform_3, window_bounds = array<i64: 256, 64>}]} {
    %c0 = arith.constant 0 : index
    %c0_0 = arith.constant 0 : index
    %0 = vector.load %arg1[%c0, %c0_0] : memref<256x32xf32, #tpu.memory_space<vmem>>, vector<256x32xf32>
    %c0_1 = arith.constant 0 : index
    %c0_2 = arith.constant 0 : index
    %1 = vector.load %arg2[%c0_1, %c0_2] : memref<32x64xf32, #tpu.memory_space<vmem>>, vector<32x64xf32>
    %cst = arith.constant dense<0.000000e+00> : vector<256x64xf32>
    %2 = tpu.matmul %0, %1, %cst {dimension_numbers = #tpu.dot_dimension_numbers<[1], [0], [0], [1], [0, 0, 1, 1], [], []>} : vector<256x32xf32>, vector<32x64xf32>, vector<256x64xf32> -> vector<256x64xf32>
    %c0_3 = arith.constant 0 : index
    %c0_4 = arith.constant 0 : index
    %3 = vector.load %arg3[%c0_3, %c0_4] : memref<1x64xf32, #tpu.memory_space<vmem>>, vector<1x64xf32>
    %4 = vector.broadcast %3 : vector<1x64xf32> to vector<256x64xf32>
    %5 = arith.addf %2, %4 : vector<256x64xf32>
    %cst_5 = arith.constant 0.000000e+00 : f32
    %6 = vector.broadcast %cst_5 : f32 to vector<256x64xf32>
    %7 = arith.maximumf %5, %6 : vector<256x64xf32>
    %c0_6 = arith.constant 0 : index
    %c0_7 = arith.constant 0 : index
    %8 = vector.load %arg4[%c0_6, %c0_7] : memref<256x64xf32, #tpu.memory_space<vmem>>, vector<256x64xf32>
    tpu.vector_store %arg4[%c0_6, %c0_7], %7 {strides = array<i32>} : memref<256x64xf32, #tpu.memory_space<vmem>>, vector<256x64xf32>,
    return
  }
  func.func @transform_0(%arg0: i32) -> (i32, i32) {
    %c0_i32 = arith.constant 0 : i32
    %c0_i32_0 = arith.constant 0 : i32
    return %arg0, %c0_i32 : i32, i32
  }
  func.func @transform_1(%arg0: i32) -> (i32, i32) {
    %c0_i32 = arith.constant 0 : i32
    %c0_i32_0 = arith.constant 0 : i32
    %c0_i32_1 = arith.constant 0 : i32
    return %c0_i32, %c0_i32_0 : i32, i32
  }
  func.func @transform_2(%arg0: i32) -> (i32, i32) {
    %c0_i32 = arith.constant 0 : i32
    %c0_i32_0 = arith.constant 0 : i32
    %c0_i32_1 = arith.constant 0 : i32
    return %c0_i32, %c0_i32_0 : i32, i32
  }
  func.func @transform_3(%arg0: i32) -> (i32, i32) {
    %c0_i32 = arith.constant 0 : i32
    %c0_i32_0 = arith.constant 0 : i32
    return %arg0, %c0_i32 : i32, i32
  }
}

</mosaic_0001>

<llo_original>
// kernel: edge_passing_forward.1
$region0: #{edge_passing_forward.1}
  #allocation0 [shape = 'u32[]', space=smem, size = 0x4, offset = 0x4, fixed_abs, tag = 'smem constant byte address 0x4 - core index']
  #allocation1 [shape = 'u32[72,128]{1,0:T(1,128)}', space=vmem, size = 0x9000, scoped, tag = 'internal scratch']
  %s0 = inlined_call_operand.vmem [shape: f32[300,32], index: 0, kind: input, shape index: {}]
  %s1 = inlined_call_operand.vmem [shape: f32[32,64], index: 1, kind: input, shape index: {}]
  %s2 = inlined_call_operand.vmem [shape: f32[1,64], index: 2, kind: input, shape index: {}]
  %s3 = inlined_call_operand.vmem [shape: f32[300,64], index: 3, kind: output, shape index: {}]
  %s4 = sld [smem:[#allocation0]]
  $region93: #{edge_passing_forward.1} parent=0
    _
  %s6 = ssub.s32 1, %s4
  %s7 = scalar_select 0, %s6, %s4
  $region1: #{edge_passing_forward.1} parent=0
    #allocation2 [shape = 'u8[262144]{0}', space=vmem, size = 0x40000, scoped, tag = 'output window, operand 0']
    loop: start=0, step=1, limit=4
    $region2: #{edge_passing_forward.1} parent=1 // loop_pre_header
      _
    $region3: #{edge_passing_forward.1} parent=1 // loop_header
      %s9 = sphi 0, %s13
      %p10 = scmp.ge.s32.totalorder %s9, 4
      %s19 = sphi 0, %s21
      %s22 = sphi 0, %s19
      %s23 = sphi 0, %s22
      %s39 = sphi 0, %s23
      %s43 = sphi 0, %s43
      %s45 = sphi 0, %s43
      %s46 = sphi 0, %s45
      %s60 = sphi 0, %s46
      %s64 = sphi 0, %s64
      %s66 = sphi 0, %s64
      %s67 = sphi 0, %s66
      %s81 = sphi 0, %s67
      %s87 = sphi 0, %s89
      %s90 = sphi 0, %s87
      %s91 = sphi 0, %s90
      %s107 = sphi 0, %s91
    $region4: #{edge_passing_forward.1} parent=1 // loop_header_branch
      %12 = sbr.rel (%p10) target = $region8
    $region5: #{edge_passing_forward.1} parent=1 // loop_body
      %s14 = ssub.s32 %s9, 1
      %s15 = ssub.s32 %s9, 2
      %s16 = sadd.s32 %s9, 1
      %s17 = ssub.s32 %s9, %s16
      %p18 = scmp.eq.s32.totalorder %s17, 0
      %s20 = sadd.s32 %s19, 1
      %s21 = scalar_select %p18, %s19, %s20
      %p24 = pneg %p18
      %p25 = scmp.eq.s32.totalorder %s9, 1
      %p26 = por %p24, %p25
      %p27 = scmp.ne.s32.totalorder %s19, %s22
      %p28 = scmp.eq.s32.totalorder %s9, 0
      %p29 = por %p27, %p28
      %p30 = scmp.ne.s32.totalorder %s19, %s22
      %p31 = scmp.eq.s32.totalorder %s14, 1
      %p32 = por %p30, %p31
      %p33 = scmp.ne.s32.totalorder %s22, %s23
      %p34 = scmp.eq.s32.totalorder %s14, 0
      %p35 = por %p33, %p34
      %p36 = scmp.ne.s32.totalorder %s22, %s23
      %p37 = scmp.eq.s32.totalorder %s15, 1
      %p38 = por %p36, %p37
      %p40 = scmp.ne.s32.totalorder %s23, %s39
      %p41 = scmp.eq.s32.totalorder %s15, 0
      %p42 = por %p40, %p41
      %s44 = sadd.s32 %s43, 1
      %p47 = scmp.eq.s32.totalorder %s9, 1
      %p48 = scmp.ne.s32.totalorder %s43, %s45
      %p49 = scmp.eq.s32.totalorder %s9, 0
      %p50 = por %p48, %p49
      %p51 = scmp.ne.s32.totalorder %s43, %s45
      %p52 = scmp.eq.s32.totalorder %s14, 1
      %p53 = por %p51, %p52
      %p54 = scmp.ne.s32.totalorder %s45, %s46
      %p55 = scmp.eq.s32.totalorder %s14, 0
      %p56 = por %p54, %p55
      %p57 = scmp.ne.s32.totalorder %s45, %s46
      %p58 = scmp.eq.s32.totalorder %s15, 1
      %p59 = por %p57, %p58
      %p61 = scmp.ne.s32.totalorder %s46, %s60
      %p62 = scmp.eq.s32.totalorder %s15, 0
      %p63 = por %p61, %p62
      %s65 = sadd.s32 %s64, 1
      %p68 = scmp.eq.s32.totalorder %s9, 1
      %p69 = scmp.ne.s32.totalorder %s64, %s66
      %p70 = scmp.eq.s32.totalorder %s9, 0
      %p71 = por %p69, %p70
      %p72 = scmp.ne.s32.totalorder %s64, %s66
      %p73 = scmp.eq.s32.totalorder %s14, 1
      %p74 = por %p72, %p73
      %p75 = scmp.ne.s32.totalorder %s66, %s67
      %p76 = scmp.eq.s32.totalorder %s14, 0
      %p77 = por %p75, %p76
      %p78 = scmp.ne.s32.totalorder %s66, %s67
      %p79 = scmp.eq.s32.totalorder %s15, 1
      %p80 = por %p78, %p79
      %p82 = scmp.ne.s32.totalorder %s67, %s81
      %p83 = scmp.eq.s32.totalorder %s15, 0
      %p84 = por %p82, %p83
      %s85 = ssub.s32 %s9, %s16
      %p86 = scmp.eq.s32.totalorder %s85, 0
      %s88 = sadd.s32 %s87, 1
      %s89 = scalar_select %p86, %s87, %s88
      %p92 = pneg %p86
      %p93 = scmp.eq.s32.totalorder %s9, 1
      %p94 = por %p92, %p93
      %p95 = scmp.ne.s32.totalorder %s87, %s90
      %p96 = scmp.eq.s32.totalorder %s9, 0
      %p97 = por %p95, %p96
      %p98 = scmp.ne.s32.totalorder %s87, %s90
      %p99 = scmp.eq.s32.totalorder %s14, 1
      %p100 = por %p98, %p99
      %p101 = scmp.ne.s32.totalorder %s90, %s91
      %p102 = scmp.eq.s32.totalorder %s14, 0
      %p103 = por %p101, %p102
      %p104 = scmp.ne.s32.totalorder %s90, %s91
      %p105 = scmp.eq.s32.totalorder %s15, 1
      %p106 = por %p104, %p105
      %p108 = scmp.ne.s32.totalorder %s91, %s107
      %p109 = scmp.eq.s32.totalorder %s15, 0
      %p110 = por %p108, %p109
      %p111 = scmp.le.s32.totalorder 1, %s9
      %p112 = scmp.lt.s32.totalorder %s9, 3
      %p113 = pnand %p111, %p112
      %p114 = pneg %p113
      // Predicated region
      $region9: #{edge_passing_forward.1} parent=5 // pred_check
        _
      $region10: #{edge_passing_forward.1} parent=5 // pred_check_branch
        %116 = sbr.rel (%p113) target = $region12
      $region11: #{edge_passing_forward.1} parent=5 // pred_region
        %s117 = ssub.s32 %s9, 1
        // Predicated region
        $region13: #{edge_passing_forward.1} parent=11 // pred_check
          %p118 = pneg %p56
        $region14: #{edge_passing_forward.1} parent=11 // pred_check_branch
          %120 = sbr.rel (%p118) target = $region16
        $region15: #{edge_passing_forward.1} parent=11 // pred_region
          _
        $region16: #{edge_passing_forward.1} parent=11 // pred_fallthru
          _
        // Predicated region
        $region17: #{edge_passing_forward.1} parent=11 // pred_check
          %p121 = pneg %p77
        $region18: #{edge_passing_forward.1} parent=11 // pred_check_branch
          %123 = sbr.rel (%p121) target = $region20
        $region19: #{edge_passing_forward.1} parent=11 // pred_region
          _
        $region20: #{edge_passing_forward.1} parent=11 // pred_fallthru
          _
      $region12: #{edge_passing_forward.1} parent=5 // pred_fallthru
        _
      %p124 = scmp.lt.s32.totalorder %s9, 2
      // Predicated region
      $region21: #{edge_passing_forward.1} parent=5 // pred_check
        %p125 = pneg %p124
      $region22: #{edge_passing_forward.1} parent=5 // pred_check_branch
        %127 = sbr.rel (%p125) target = $region24
      $region23: #{edge_passing_forward.1} parent=5 // pred_region
        // Predicated region
        $region25: #{edge_passing_forward.1} parent=23 // pred_check
          %p128 = pneg %p29
        $region26: #{edge_passing_forward.1} parent=23 // pred_check_branch
          %130 = sbr.rel (%p128) target = $region28
        $region27: #{edge_passing_forward.1} parent=23 // pred_region
          %s131 = smul.u32 32, %s9
          %s132 = ssub.s32 38, %s131
          %p133 = scmp.lt.s32.totalorder %s132, 32
          %s134 = scalar_select %p133, %s132, 32
          %s135 = smul.u32 8, %s134
          %p136 = scmp.lt.s32.totalorder %s131, 37
          %s137 = scalar_select %p136, %s131, 37
          %s138 = smul.addr %s137, 8
          %s139 = scalar_lea.vmem %s0, %s138
          %s140 = smul.u32 32, %s9
          %s141 = ssub.s32 38, %s140
          %p142 = scmp.lt.s32.totalorder %s141, 32
          %s143 = scalar_select %p142, %s141, 32
          %s144 = smul.u32 8, %s143
        $region28: #{edge_passing_forward.1} parent=23 // pred_fallthru
          _
      $region24: #{edge_passing_forward.1} parent=5 // pred_fallthru
        _
      %p145 = scmp.le.s32.totalorder 1, %s9
      %p146 = scmp.lt.s32.totalorder %s9, 3
      %p147 = pnand %p145, %p146
      %p148 = pneg %p147
      // Predicated region
      $region29: #{edge_passing_forward.1} parent=5 // pred_check
        _
      $region30: #{edge_passing_forward.1} parent=5 // pred_check_branch
        %150 = sbr.rel (%p147) target = $region32
      $region31: #{edge_passing_forward.1} parent=5 // pred_region
        %s151 = ssub.s32 %s9, 1
        %s152 = smul.u32 32, %s14
        %s153 = ssub.s32 38, %s152
        %p154 = scmp.lt.s32.totalorder %s153, 32
        %s155 = scalar_select %p154, %s153, 32
        %s156 = smul.u32 8, %s155
        %p157 = scmp.lt.s32.totalorder %s152, 37
        %s158 = scalar_select %p157, %s152, 37
        %s159 = smul.addr %s158, 8
        %s160 = scalar_lea.vmem %s0, %s159
        %p161 = pneg %p35
        %p162 = pneg %p32
        %p163 = pneg %p56
        %p164 = pneg %p53
        %p165 = pneg %p77
        %p166 = pneg %p74
        %p167 = pneg %p103
        %p168 = pneg %p100
        %s169 = sand.u32 %s90, 1
        %s170 = sand.u32 %s90, 1
        %s171 = smul.addr %s170, 256
        %s172 = scalar_lea.vmem [#allocation2], %s171
        %s173 = smul.u32 32, %s14
        %s174 = ssub.s32 38, %s173
        %p175 = scmp.lt.s32.totalorder %s174, 32
        %s176 = scalar_select %p175, %s174, 32
        %s177 = smul.u32 8, %s176
        %p178 = scmp.lt.s32.totalorder %s173, 37
        %s179 = scalar_select %p178, %s173, 37
        %s180 = smul.addr %s179, 8
        %s181 = scalar_lea.vmem %s0, %s180
        %s182 = smul.u32 32, %s14
        %s183 = ssub.s32 38, %s182
        %p184 = scmp.lt.s32.totalorder %s183, 32
        %s185 = scalar_select %p184, %s183, 32
        %s186 = smul.u32 8, %s185
        %s187 = smul.u32 32, %s14
        %s188 = ssub.s32 38, %s187
        %p189 = scmp.lt.s32.totalorder %s188, 32
        %s190 = scalar_select %p189, %s188, 32
        %s191 = smul.u32 8, %s190
        %v192 = vld [vmem:[%s181] sm:$0xff]
        %v193 = vld [vmem:[%s181 + $0x8] sm:$0xff]
        %v194 = vld [vmem:[%s181 + $0x10] sm:$0xff]
        %v195 = vld [vmem:[%s181 + $0x18] sm:$0xff]
        %v196 = vld [vmem:[%s181 + $0x20] sm:$0xff]
        %v197 = vld [vmem:[%s181 + $0x28] sm:$0xff]
        %v198 = vld [vmem:[%s181 + $0x30] sm:$0xff]
        %v199 = vld [vmem:[%s181 + $0x38] sm:$0xff]
        %v200 = vld [vmem:[%s181 + $0x40] sm:$0xff]
        %v201 = vld [vmem:[%s181 + $0x48] sm:$0xff]
        %v202 = vld [vmem:[%s181 + $0x50] sm:$0xff]
        %v203 = vld [vmem:[%s181 + $0x58] sm:$0xff]
        %v204 = vld [vmem:[%s181 + $0x60] sm:$0xff]
        %v205 = vld [vmem:[%s181 + $0x68] sm:$0xff]
        %v206 = vld [vmem:[%s181 + $0x70] sm:$0xff]
        %v207 = vld [vmem:[%s181 + $0x78] sm:$0xff]
        %v208 = vld [vmem:[%s181 + $0x80] sm:$0xff]
        %v209 = vld [vmem:[%s181 + $0x88] sm:$0xff]
        %v210 = vld [vmem:[%s181 + $0x90] sm:$0xff]
        %v211 = vld [vmem:[%s181 + $0x98] sm:$0xff]
        %v212 = vld [vmem:[%s181 + $0xa0] sm:$0xff]
        %v213 = vld [vmem:[%s181 + $0xa8] sm:$0xff]
        %v214 = vld [vmem:[%s181 + $0xb0] sm:$0xff]
        %v215 = vld [vmem:[%s181 + $0xb8] sm:$0xff]
        %v216 = vld [vmem:[%s181 + $0xc0] sm:$0xff]
        %v217 = vld [vmem:[%s181 + $0xc8] sm:$0xff]
        %v218 = vld [vmem:[%s181 + $0xd0] sm:$0xff]
        %v219 = vld [vmem:[%s181 + $0xd8] sm:$0xff]
        %v220 = vld [vmem:[%s181 + $0xe0] sm:$0xff]
        %v221 = vld [vmem:[%s181 + $0xe8] sm:$0xff]
        %v222 = vld [vmem:[%s181 + $0xf0] sm:$0xff]
        %v223 = vld [vmem:[%s181 + $0xf8] sm:$0xff]
        %v224 = vld [vmem:[%s1] sm:$0xff]
        %v225 = vld [vmem:[%s1 + $0x8] sm:$0xff]
        %v226 = vld [vmem:[%s1 + $0x10] sm:$0xff]
        %v227 = vld [vmem:[%s1 + $0x18] sm:$0xff]
        %v228 = vld [vmem:[%s2] sm:$0x1]
        %v230 = vperm.slane %v228, 0
        %vm232 = vcmask 261120
        %v234 = vsel %vm232, %v192, 0
        %v237 = vsel %vm232, %v193, 0
        %v240 = vsel %vm232, %v194, 0
        %v243 = vsel %vm232, %v195, 0
        %v246 = vsel %vm232, %v196, 0
        %v249 = vsel %vm232, %v197, 0
        %v252 = vsel %vm232, %v198, 0
        %v255 = vsel %vm232, %v199, 0
        %v258 = vsel %vm232, %v200, 0
        %v261 = vsel %vm232, %v201, 0
        %v264 = vsel %vm232, %v202, 0
        %v267 = vsel %vm232, %v203, 0
        %v270 = vsel %vm232, %v204, 0
        %v273 = vsel %vm232, %v205, 0
        %v276 = vsel %vm232, %v206, 0
        %v279 = vsel %vm232, %v207, 0
        %v282 = vsel %vm232, %v208, 0
        %v285 = vsel %vm232, %v209, 0
        %v288 = vsel %vm232, %v210, 0
        %v291 = vsel %vm232, %v211, 0
        %v294 = vsel %vm232, %v212, 0
        %v297 = vsel %vm232, %v213, 0
        %v300 = vsel %vm232, %v214, 0
        %v303 = vsel %vm232, %v215, 0
        %v306 = vsel %vm232, %v216, 0
        %v309 = vsel %vm232, %v217, 0
        %v312 = vsel %vm232, %v218, 0
        %v315 = vsel %vm232, %v219, 0
        %v318 = vsel %vm232, %v220, 0
        %v321 = vsel %vm232, %v221, 0
        %v324 = vsel %vm232, %v222, 0
        %v327 = vsel %vm232, %v223, 0
        %329 = vmatpush.msra.mxu0 0.0
        %330 = vmatpush.msra.mxu0 0.0
        %331 = vmatpush.msra.mxu0 0.0
        %332 = vmatpush.msra.mxu0 0.0
        %333 = vmatpush.msra.mxu0 0.0
        %334 = vmatpush.msra.mxu0 0.0
        %335 = vmatpush.msra.mxu0 0.0
        %336 = vmatpush.msra.mxu0 0.0
        %337 = vmatpush.msra.mxu0 0.0
        %338 = vmatpush.msra.mxu0 0.0
        %339 = vmatpush.msra.mxu0 0.0
        %340 = vmatpush.msra.mxu0 0.0
        %341 = vmatpush.msra.mxu0 %v227
        %342 = vmatpush.msra.mxu0 %v226
        %343 = vmatpush.msra.mxu0 %v225
        %344 = vmatpush.msra.mxu0 %v224
        %345 = vmatmul.f32.gmra.mxu0 %v234
        %v346 = vpop.f32.mrf.mxu0
        %v347 = vadd.f32 %v230, %v346
        %348 = vmatmul.f32.gmra.mxu0 %v237
        %v349 = vpop.f32.mrf.mxu0
        %v350 = vadd.f32 %v230, %v349
        %351 = vmatmul.f32.gmra.mxu0 %v240
        %v352 = vpop.f32.mrf.mxu0
        %v353 = vadd.f32 %v230, %v352
        %354 = vmatmul.f32.gmra.mxu0 %v243
        %v355 = vpop.f32.mrf.mxu0
        %v356 = vadd.f32 %v230, %v355
        %357 = vmatmul.f32.gmra.mxu0 %v246
        %v358 = vpop.f32.mrf.mxu0
        %v359 = vadd.f32 %v230, %v358
        %360 = vmatmul.f32.gmra.mxu0 %v249
        %v361 = vpop.f32.mrf.mxu0
        %v362 = vadd.f32 %v230, %v361
        %363 = vmatmul.f32.gmra.mxu0 %v252
        %v364 = vpop.f32.mrf.mxu0
        %v365 = vadd.f32 %v230, %v364
        %366 = vmatmul.f32.gmra.mxu0 %v255
        %v367 = vpop.f32.mrf.mxu0
        %v368 = vadd.f32 %v230, %v367
        %369 = vmatmul.f32.gmra.mxu0 %v258
        %v370 = vpop.f32.mrf.mxu0
        %v371 = vadd.f32 %v230, %v370
        %372 = vmatmul.f32.gmra.mxu0 %v261
        %v373 = vpop.f32.mrf.mxu0
        %v374 = vadd.f32 %v230, %v373
        %375 = vmatmul.f32.gmra.mxu0 %v264
        %v376 = vpop.f32.mrf.mxu0
        %v377 = vadd.f32 %v230, %v376
        %378 = vmatmul.f32.gmra.mxu0 %v267
        %v379 = vpop.f32.mrf.mxu0
        %v380 = vadd.f32 %v230, %v379
        %381 = vmatmul.f32.gmra.mxu0 %v270
        %v382 = vpop.f32.mrf.mxu0
        %v383 = vadd.f32 %v230, %v382
        %384 = vmatmul.f32.gmra.mxu0 %v273
        %v385 = vpop.f32.mrf.mxu0
        %v386 = vadd.f32 %v230, %v385
        %387 = vmatmul.f32.gmra.mxu0 %v276
        %v388 = vpop.f32.mrf.mxu0
        %v389 = vadd.f32 %v230, %v388
        %390 = vmatmul.f32.gmra.mxu0 %v279
        %v391 = vpop.f32.mrf.mxu0
        %v392 = vadd.f32 %v230, %v391
        %393 = vmatmul.f32.gmra.mxu0 %v282
        %v394 = vpop.f32.mrf.mxu0
        %v395 = vadd.f32 %v230, %v394
        %396 = vmatmul.f32.gmra.mxu0 %v285
        %v397 = vpop.f32.mrf.mxu0
        %v398 = vadd.f32 %v230, %v397
        %399 = vmatmul.f32.gmra.mxu0 %v288
        %v400 = vpop.f32.mrf.mxu0
        %v401 = vadd.f32 %v230, %v400
        %402 = vmatmul.f32.gmra.mxu0 %v291
        %v403 = vpop.f32.mrf.mxu0
        %v404 = vadd.f32 %v230, %v403
        %405 = vmatmul.f32.gmra.mxu0 %v294
        %v406 = vpop.f32.mrf.mxu0
        %v407 = vadd.f32 %v230, %v406
        %408 = vmatmul.f32.gmra.mxu0 %v297
        %v409 = vpop.f32.mrf.mxu0
        %v410 = vadd.f32 %v230, %v409
        %411 = vmatmul.f32.gmra.mxu0 %v300
        %v412 = vpop.f32.mrf.mxu0
        %v413 = vadd.f32 %v230, %v412
        %414 = vmatmul.f32.gmra.mxu0 %v303
        %v415 = vpop.f32.mrf.mxu0
        %v416 = vadd.f32 %v230, %v415
        %417 = vmatmul.f32.gmra.mxu0 %v306
        %v418 = vpop.f32.mrf.mxu0
        %v419 = vadd.f32 %v230, %v418
        %420 = vmatmul.f32.gmra.mxu0 %v309
        %v421 = vpop.f32.mrf.mxu0
        %v422 = vadd.f32 %v230, %v421
        %423 = vmatmul.f32.gmra.mxu0 %v312
        %v424 = vpop.f32.mrf.mxu0
        %v425 = vadd.f32 %v230, %v424
        %426 = vmatmul.f32.gmra.mxu0 %v315
        %v427 = vpop.f32.mrf.mxu0
        %v428 = vadd.f32 %v230, %v427
        %429 = vmatmul.f32.gmra.mxu0 %v318
        %v430 = vpop.f32.mrf.mxu0
        %v431 = vadd.f32 %v230, %v430
        %432 = vmatmul.f32.gmra.mxu0 %v321
        %v433 = vpop.f32.mrf.mxu0
        %v434 = vadd.f32 %v230, %v433
        %435 = vmatmul.f32.gmra.mxu0 %v324
        %v436 = vpop.f32.mrf.mxu0
        %v437 = vadd.f32 %v230, %v436
        %438 = vmatmul.f32.gmra.mxu0 %v327
        %v439 = vpop.f32.mrf.mxu0
        %v440 = vadd.f32 %v230, %v439
        %441 = vdwg.mxu0
        %v442 = vmax.f32 %v347, 0.0
        %v443 = vmax.f32 %v350, 0.0
        %v444 = vmax.f32 %v353, 0.0
        %v445 = vmax.f32 %v356, 0.0
        %v446 = vmax.f32 %v359, 0.0
        %v447 = vmax.f32 %v362, 0.0
        %v448 = vmax.f32 %v365, 0.0
        %v449 = vmax.f32 %v368, 0.0
        %v450 = vmax.f32 %v371, 0.0
        %v451 = vmax.f32 %v374, 0.0
        %v452 = vmax.f32 %v377, 0.0
        %v453 = vmax.f32 %v380, 0.0
        %v454 = vmax.f32 %v383, 0.0
        %v455 = vmax.f32 %v386, 0.0
        %v456 = vmax.f32 %v389, 0.0
        %v457 = vmax.f32 %v392, 0.0
        %v458 = vmax.f32 %v395, 0.0
        %v459 = vmax.f32 %v398, 0.0
        %v460 = vmax.f32 %v401, 0.0
        %v461 = vmax.f32 %v404, 0.0
        %v462 = vmax.f32 %v407, 0.0
        %v463 = vmax.f32 %v410, 0.0
        %v464 = vmax.f32 %v413, 0.0
        %v465 = vmax.f32 %v416, 0.0
        %v466 = vmax.f32 %v419, 0.0
        %v467 = vmax.f32 %v422, 0.0
        %v468 = vmax.f32 %v425, 0.0
        %v469 = vmax.f32 %v428, 0.0
        %v470 = vmax.f32 %v431, 0.0
        %v471 = vmax.f32 %v434, 0.0
        %v472 = vmax.f32 %v437, 0.0
        %v473 = vmax.f32 %v440, 0.0
        %vm474 = vcmask 523264
        %475 = vst.msk [vmem:[%s172] sm:$0xff] %vm474, %v442
        %476 = vst.msk [vmem:[%s172 + $0x8] sm:$0xff] %vm474, %v443
        %477 = vst.msk [vmem:[%s172 + $0x10] sm:$0xff] %vm474, %v444
        %478 = vst.msk [vmem:[%s172 + $0x18] sm:$0xff] %vm474, %v445
        %479 = vst.msk [vmem:[%s172 + $0x20] sm:$0xff] %vm474, %v446
        %480 = vst.msk [vmem:[%s172 + $0x28] sm:$0xff] %vm474, %v447
        %481 = vst.msk [vmem:[%s172 + $0x30] sm:$0xff] %vm474, %v448
        %482 = vst.msk [vmem:[%s172 + $0x38] sm:$0xff] %vm474, %v449
        %483 = vst.msk [vmem:[%s172 + $0x40] sm:$0xff] %vm474, %v450
        %484 = vst.msk [vmem:[%s172 + $0x48] sm:$0xff] %vm474, %v451
        %485 = vst.msk [vmem:[%s172 + $0x50] sm:$0xff] %vm474, %v452
        %486 = vst.msk [vmem:[%s172 + $0x58] sm:$0xff] %vm474, %v453
        %487 = vst.msk [vmem:[%s172 + $0x60] sm:$0xff] %vm474, %v454
        %488 = vst.msk [vmem:[%s172 + $0x68] sm:$0xff] %vm474, %v455
        %489 = vst.msk [vmem:[%s172 + $0x70] sm:$0xff] %vm474, %v456
        %490 = vst.msk [vmem:[%s172 + $0x78] sm:$0xff] %vm474, %v457
        %491 = vst.msk [vmem:[%s172 + $0x80] sm:$0xff] %vm474, %v458
        %492 = vst.msk [vmem:[%s172 + $0x88] sm:$0xff] %vm474, %v459
        %493 = vst.msk [vmem:[%s172 + $0x90] sm:$0xff] %vm474, %v460
        %494 = vst.msk [vmem:[%s172 + $0x98] sm:$0xff] %vm474, %v461
        %495 = vst.msk [vmem:[%s172 + $0xa0] sm:$0xff] %vm474, %v462
        %496 = vst.msk [vmem:[%s172 + $0xa8] sm:$0xff] %vm474, %v463
        %497 = vst.msk [vmem:[%s172 + $0xb0] sm:$0xff] %vm474, %v464
        %498 = vst.msk [vmem:[%s172 + $0xb8] sm:$0xff] %vm474, %v465
        %499 = vst.msk [vmem:[%s172 + $0xc0] sm:$0xff] %vm474, %v466
        %500 = vst.msk [vmem:[%s172 + $0xc8] sm:$0xff] %vm474, %v467
        %501 = vst.msk [vmem:[%s172 + $0xd0] sm:$0xff] %vm474, %v468
        %502 = vst.msk [vmem:[%s172 + $0xd8] sm:$0xff] %vm474, %v469
        %503 = vst.msk [vmem:[%s172 + $0xe0] sm:$0xff] %vm474, %v470
        %504 = vst.msk [vmem:[%s172 + $0xe8] sm:$0xff] %vm474, %v471
        %505 = vst.msk [vmem:[%s172 + $0xf0] sm:$0xff] %vm474, %v472
        %506 = vst.msk [vmem:[%s172 + $0xf8] sm:$0xff] %vm474, %v473
        %s507 = sand.u32 %s90, 1
        %s508 = sand.u32 %s90, 1
        %s509 = smul.addr %s508, 256
        %s510 = scalar_lea.vmem [#allocation2], %s509
        // Predicated region
        $region33: #{edge_passing_forward.1} parent=31 // pred_check
          %p511 = pneg %p100
        $region34: #{edge_passing_forward.1} parent=31 // pred_check_branch
          %513 = sbr.rel (%p511) target = $region36
        $region35: #{edge_passing_forward.1} parent=31 // pred_region
          %s514 = smul.u32 32, %s14
          %s515 = ssub.s32 38, %s514
          %p516 = scmp.lt.s32.totalorder %s515, 32
          %s517 = scalar_select %p516, %s515, 32
          %s518 = smul.u32 8, %s517
          %p519 = scmp.ne.s32.totalorder 0, %s518
          %s520 = smul.addr %s514, 8
          %s521 = scalar_lea.vmem %s3, %s520
          // Predicated region
          $region37: #{edge_passing_forward.1} parent=35 // pred_check
            %p522 = pneg %p519
          $region38: #{edge_passing_forward.1} parent=35 // pred_check_branch
            %524 = sbr.rel (%p522) target = $region40
          $region39: #{edge_passing_forward.1} parent=35 // pred_region
            // Predicated region
            $region41: #{edge_passing_forward.1} parent=39 // pred_check
              _
            $region42: #{edge_passing_forward.1} parent=39 // pred_check_branch
              %526 = sbr.rel (0) target = $region44
            $region43: #{edge_passing_forward.1} parent=39 // pred_region
              // Predicated region
              $region63: #{edge_passing_forward.1} parent=43 // pred_check
                _
              $region64: #{edge_passing_forward.1} parent=43 // pred_check_branch
                %638 = sbr.rel (0) target = $region66
              $region65: #{edge_passing_forward.1} parent=43 // pred_region
                %s639 = sshrl.u32 %s517, 5
                // While loop
                $region67: #{edge_passing_forward.1} parent=65 // loop_pre_header
                  _
                $region68: #{edge_passing_forward.1} parent=65 // loop_header
                  %s641 = sphi 0, %s643
                  %p642 = scmp.ge.s32.totalorder %s641, %s639
                  %s646 = sphi 0, %s715
                  %s647 = sphi %s510, %s718
                  %s648 = sphi %s521, %s719
                $region69: #{edge_passing_forward.1} parent=65 // loop_header_branch
                  %645 = sbr.rel (%p642) target = $region73
                $region70: #{edge_passing_forward.1} parent=65 // loop_body
                  %v649 = vld [vmem:[%s647] sm:$0xff]
                  %650 = vst [vmem:[%s648] sm:$0xff] %v649
                  %v651 = vld [vmem:[%s647 + $0x8] sm:$0xff]
                  %652 = vst [vmem:[%s648 + $0x8] sm:$0xff] %v651
                  %v653 = vld [vmem:[%s647 + $0x10] sm:$0xff]
                  %654 = vst [vmem:[%s648 + $0x10] sm:$0xff] %v653
                  %v655 = vld [vmem:[%s647 + $0x18] sm:$0xff]
                  %656 = vst [vmem:[%s648 + $0x18] sm:$0xff] %v655
                  %v657 = vld [vmem:[%s647 + $0x20] sm:$0xff]
                  %658 = vst [vmem:[%s648 + $0x20] sm:$0xff] %v657
                  %v659 = vld [vmem:[%s647 + $0x28] sm:$0xff]
                  %660 = vst [vmem:[%s648 + $0x28] sm:$0xff] %v659
                  %v661 = vld [vmem:[%s647 + $0x30] sm:$0xff]
                  %662 = vst [vmem:[%s648 + $0x30] sm:$0xff] %v661
                  %v663 = vld [vmem:[%s647 + $0x38] sm:$0xff]
                  %664 = vst [vmem:[%s648 + $0x38] sm:$0xff] %v663
                  %v665 = vld [vmem:[%s647 + $0x40] sm:$0xff]
                  %666 = vst [vmem:[%s648 + $0x40] sm:$0xff] %v665
                  %v667 = vld [vmem:[%s647 + $0x48] sm:$0xff]
                  %668 = vst [vmem:[%s648 + $0x48] sm:$0xff] %v667
                  %v669 = vld [vmem:[%s647 + $0x50] sm:$0xff]
                  %670 = vst [vmem:[%s648 + $0x50] sm:$0xff] %v669
                  %v671 = vld [vmem:[%s647 + $0x58] sm:$0xff]
                  %672 = vst [vmem:[%s648 + $0x58] sm:$0xff] %v671
                  %v673 = vld [vmem:[%s647 + $0x60] sm:$0xff]
                  %674 = vst [vmem:[%s648 + $0x60] sm:$0xff] %v673
                  %v675 = vld [vmem:[%s647 + $0x68] sm:$0xff]
                  %676 = vst [vmem:[%s648 + $0x68] sm:$0xff] %v675
                  %v677 = vld [vmem:[%s647 + $0x70] sm:$0xff]
                  %678 = vst [vmem:[%s648 + $0x70] sm:$0xff] %v677
                  %v679 = vld [vmem:[%s647 + $0x78] sm:$0xff]
                  %680 = vst [vmem:[%s648 + $0x78] sm:$0xff] %v679
                  %v681 = vld [vmem:[%s647 + $0x80] sm:$0xff]
                  %682 = vst [vmem:[%s648 + $0x80] sm:$0xff] %v681
                  %v683 = vld [vmem:[%s647 + $0x88] sm:$0xff]
                  %684 = vst [vmem:[%s648 + $0x88] sm:$0xff] %v683
                  %v685 = vld [vmem:[%s647 + $0x90] sm:$0xff]
                  %686 = vst [vmem:[%s648 + $0x90] sm:$0xff] %v685
                  %v687 = vld [vmem:[%s647 + $0x98] sm:$0xff]
                  %688 = vst [vmem:[%s648 + $0x98] sm:$0xff] %v687
                  %v689 = vld [vmem:[%s647 + $0xa0] sm:$0xff]
                  %690 = vst [vmem:[%s648 + $0xa0] sm:$0xff] %v689
                  %v691 = vld [vmem:[%s647 + $0xa8] sm:$0xff]
                  %692 = vst [vmem:[%s648 + $0xa8] sm:$0xff] %v691
                  %v693 = vld [vmem:[%s647 + $0xb0] sm:$0xff]
                  %694 = vst [vmem:[%s648 + $0xb0] sm:$0xff] %v693
                  %v695 = vld [vmem:[%s647 + $0xb8] sm:$0xff]
                  %696 = vst [vmem:[%s648 + $0xb8] sm:$0xff] %v695
                  %v697 = vld [vmem:[%s647 + $0xc0] sm:$0xff]
                  %698 = vst [vmem:[%s648 + $0xc0] sm:$0xff] %v697
                  %v699 = vld [vmem:[%s647 + $0xc8] sm:$0xff]
                  %700 = vst [vmem:[%s648 + $0xc8] sm:$0xff] %v699
                  %v701 = vld [vmem:[%s647 + $0xd0] sm:$0xff]
                  %702 = vst [vmem:[%s648 + $0xd0] sm:$0xff] %v701
                  %v703 = vld [vmem:[%s647 + $0xd8] sm:$0xff]
                  %704 = vst [vmem:[%s648 + $0xd8] sm:$0xff] %v703
                  %v705 = vld [vmem:[%s647 + $0xe0] sm:$0xff]
                  %706 = vst [vmem:[%s648 + $0xe0] sm:$0xff] %v705
                  %v707 = vld [vmem:[%s647 + $0xe8] sm:$0xff]
                  %708 = vst [vmem:[%s648 + $0xe8] sm:$0xff] %v707
                  %v709 = vld [vmem:[%s647 + $0xf0] sm:$0xff]
                  %710 = vst [vmem:[%s648 + $0xf0] sm:$0xff] %v709
                  %v711 = vld [vmem:[%s647 + $0xf8] sm:$0xff]
                  %712 = vst [vmem:[%s648 + $0xf8] sm:$0xff] %v711
                  %s713 = sadd.s32 1, %s646
                  %p714 = scmp.ge.s32.totalorder %s713, %s639
                  %s715 = scalar_select %p714, 0, %s713
                  %s716 = smul.u32 %s715, 256
                  %s717 = smul.u32 %s715, 256
                  %s718 = scalar_lea.vmem %s510, %s716 [#allocation2]
                  %s719 = scalar_lea.vmem %s521, %s717
                $region71: #{edge_passing_forward.1} parent=65 // loop_footer
                  %s643 = sadd.s32 %s641, 1
                $region72: #{edge_passing_forward.1} parent=65 // loop_footer_branch
                  %640 = sbr.rel target = $region68
                $region73: #{edge_passing_forward.1} parent=65 // loop_exit
                  _
                %s720 = sshrl.u32 %s517, 5
                %s721 = sand.u32 %s517, 31
                %s722 = smul.u32 %s720, 32
                %s723 = smul.u32 8, %s722
                %s724 = scalar_lea.vmem %s510, %s723 [#allocation2]
                %s725 = smul.u32 8, %s722
                %s726 = scalar_lea.vmem %s521, %s725
                // While loop
                $region74: #{edge_passing_forward.1} parent=65 // loop_pre_header
                  _
                $region75: #{edge_passing_forward.1} parent=65 // loop_header
                  %s728 = sphi 0, %s730
                  %p729 = scmp.ge.s32.totalorder %s728, %s721
                  %s733 = sphi 0, %s740
                  %s734 = sphi %s724, %s743
                  %s735 = sphi %s726, %s744
                $region76: #{edge_passing_forward.1} parent=65 // loop_header_branch
                  %732 = sbr.rel (%p729) target = $region80
                $region77: #{edge_passing_forward.1} parent=65 // loop_body
                  %v736 = vld [vmem:[%s734] sm:$0xff]
                  %737 = vst [vmem:[%s735] sm:$0xff] %v736
                  %s738 = sadd.s32 1, %s733
                  %p739 = scmp.ge.s32.totalorder %s738, %s721
                  %s740 = scalar_select %p739, 0, %s738
                  %s741 = smul.u32 %s740, 8
                  %s742 = smul.u32 %s740, 8
                  %s743 = scalar_lea.vmem %s724, %s741 [#allocation2]
                  %s744 = scalar_lea.vmem %s726, %s742
                $region78: #{edge_passing_forward.1} parent=65 // loop_footer
                  %s730 = sadd.s32 %s728, 1
                $region79: #{edge_passing_forward.1} parent=65 // loop_footer_branch
                  %727 = sbr.rel target = $region75
                $region80: #{edge_passing_forward.1} parent=65 // loop_exit
                  _
              $region66: #{edge_passing_forward.1} parent=43 // pred_fallthru
                _
              // Predicated region
              $region81: #{edge_passing_forward.1} parent=43 // pred_check
                _
              $region82: #{edge_passing_forward.1} parent=43 // pred_check_branch
                %746 = sbr.rel target = $region84
              $region83: #{edge_passing_forward.1} parent=43 // pred_region
                _
              $region84: #{edge_passing_forward.1} parent=43 // pred_fallthru
                _
            $region44: #{edge_passing_forward.1} parent=39 // pred_fallthru
              _
            // Predicated region
            $region45: #{edge_passing_forward.1} parent=39 // pred_check
              _
            $region46: #{edge_passing_forward.1} parent=39 // pred_check_branch
              %528 = sbr.rel target = $region48
            $region47: #{edge_passing_forward.1} parent=39 // pred_region
              %s530 = ssub.s32 256, 1
              %s531 = sshrl.u32 %s517, 5
              // While loop
              $region49: #{edge_passing_forward.1} parent=47 // loop_pre_header
                _
              $region50: #{edge_passing_forward.1} parent=47 // loop_header
                %s533 = sphi 0, %s535
                %p534 = scmp.ge.s32.totalorder %s533, %s531
                %s538 = sphi 0, %s607
                %s539 = sphi %s510, %s610
                %s540 = sphi %s521, %s611
              $region51: #{edge_passing_forward.1} parent=47 // loop_header_branch
                %537 = sbr.rel (%p534) target = $region55
              $region52: #{edge_passing_forward.1} parent=47 // loop_body
                %v541 = vld [vmem:[%s539] sm:%s530]
                %542 = vst [vmem:[%s540] sm:%s530] %v541
                %v543 = vld [vmem:[%s539 + $0x8] sm:%s530]
                %544 = vst [vmem:[%s540 + $0x8] sm:%s530] %v543
                %v545 = vld [vmem:[%s539 + $0x10] sm:%s530]
                %546 = vst [vmem:[%s540 + $0x10] sm:%s530] %v545
                %v547 = vld [vmem:[%s539 + $0x18] sm:%s530]
                %548 = vst [vmem:[%s540 + $0x18] sm:%s530] %v547
                %v549 = vld [vmem:[%s539 + $0x20] sm:%s530]
                %550 = vst [vmem:[%s540 + $0x20] sm:%s530] %v549
                %v551 = vld [vmem:[%s539 + $0x28] sm:%s530]
                %552 = vst [vmem:[%s540 + $0x28] sm:%s530] %v551
                %v553 = vld [vmem:[%s539 + $0x30] sm:%s530]
                %554 = vst [vmem:[%s540 + $0x30] sm:%s530] %v553
                %v555 = vld [vmem:[%s539 + $0x38] sm:%s530]
                %556 = vst [vmem:[%s540 + $0x38] sm:%s530] %v555
                %v557 = vld [vmem:[%s539 + $0x40] sm:%s530]
                %558 = vst [vmem:[%s540 + $0x40] sm:%s530] %v557
                %v559 = vld [vmem:[%s539 + $0x48] sm:%s530]
                %560 = vst [vmem:[%s540 + $0x48] sm:%s530] %v559
                %v561 = vld [vmem:[%s539 + $0x50] sm:%s530]
                %562 = vst [vmem:[%s540 + $0x50] sm:%s530] %v561
                %v563 = vld [vmem:[%s539 + $0x58] sm:%s530]
                %564 = vst [vmem:[%s540 + $0x58] sm:%s530] %v563
                %v565 = vld [vmem:[%s539 + $0x60] sm:%s530]
                %566 = vst [vmem:[%s540 + $0x60] sm:%s530] %v565
                %v567 = vld [vmem:[%s539 + $0x68] sm:%s530]
                %568 = vst [vmem:[%s540 + $0x68] sm:%s530] %v567
                %v569 = vld [vmem:[%s539 + $0x70] sm:%s530]
                %570 = vst [vmem:[%s540 + $0x70] sm:%s530] %v569
                %v571 = vld [vmem:[%s539 + $0x78] sm:%s530]
                %572 = vst [vmem:[%s540 + $0x78] sm:%s530] %v571
                %v573 = vld [vmem:[%s539 + $0x80] sm:%s530]
                %574 = vst [vmem:[%s540 + $0x80] sm:%s530] %v573
                %v575 = vld [vmem:[%s539 + $0x88] sm:%s530]
                %576 = vst [vmem:[%s540 + $0x88] sm:%s530] %v575
                %v577 = vld [vmem:[%s539 + $0x90] sm:%s530]
                %578 = vst [vmem:[%s540 + $0x90] sm:%s530] %v577
                %v579 = vld [vmem:[%s539 + $0x98] sm:%s530]
                %580 = vst [vmem:[%s540 + $0x98] sm:%s530] %v579
                %v581 = vld [vmem:[%s539 + $0xa0] sm:%s530]
                %582 = vst [vmem:[%s540 + $0xa0] sm:%s530] %v581
                %v583 = vld [vmem:[%s539 + $0xa8] sm:%s530]
                %584 = vst [vmem:[%s540 + $0xa8] sm:%s530] %v583
                %v585 = vld [vmem:[%s539 + $0xb0] sm:%s530]
                %586 = vst [vmem:[%s540 + $0xb0] sm:%s530] %v585
                %v587 = vld [vmem:[%s539 + $0xb8] sm:%s530]
                %588 = vst [vmem:[%s540 + $0xb8] sm:%s530] %v587
                %v589 = vld [vmem:[%s539 + $0xc0] sm:%s530]
                %590 = vst [vmem:[%s540 + $0xc0] sm:%s530] %v589
                %v591 = vld [vmem:[%s539 + $0xc8] sm:%s530]
                %592 = vst [vmem:[%s540 + $0xc8] sm:%s530] %v591
                %v593 = vld [vmem:[%s539 + $0xd0] sm:%s530]
                %594 = vst [vmem:[%s540 + $0xd0] sm:%s530] %v593
                %v595 = vld [vmem:[%s539 + $0xd8] sm:%s530]
                %596 = vst [vmem:[%s540 + $0xd8] sm:%s530] %v595
                %v597 = vld [vmem:[%s539 + $0xe0] sm:%s530]
                %598 = vst [vmem:[%s540 + $0xe0] sm:%s530] %v597
                %v599 = vld [vmem:[%s539 + $0xe8] sm:%s530]
                %600 = vst [vmem:[%s540 + $0xe8] sm:%s530] %v599
                %v601 = vld [vmem:[%s539 + $0xf0] sm:%s530]
                %602 = vst [vmem:[%s540 + $0xf0] sm:%s530] %v601
                %v603 = vld [vmem:[%s539 + $0xf8] sm:%s530]
                %604 = vst [vmem:[%s540 + $0xf8] sm:%s530] %v603
                %s605 = sadd.s32 1, %s538
                %p606 = scmp.ge.s32.totalorder %s605, %s531
                %s607 = scalar_select %p606, 0, %s605
                %s608 = smul.u32 %s607, 256
                %s609 = smul.u32 %s607, 256
                %s610 = scalar_lea.vmem %s510, %s608 [#allocation2]
                %s611 = scalar_lea.vmem %s521, %s609
              $region53: #{edge_passing_forward.1} parent=47 // loop_footer
                %s535 = sadd.s32 %s533, 1
              $region54: #{edge_passing_forward.1} parent=47 // loop_footer_branch
                %532 = sbr.rel target = $region50
              $region55: #{edge_passing_forward.1} parent=47 // loop_exit
                _
              %s612 = sshrl.u32 %s517, 5
              %s613 = sand.u32 %s517, 31
              %s614 = smul.u32 %s612, 32
              %s615 = smul.u32 8, %s614
              %s616 = scalar_lea.vmem %s510, %s615 [#allocation2]
              %s617 = smul.u32 8, %s614
              %s618 = scalar_lea.vmem %s521, %s617
              // While loop
              $region56: #{edge_passing_forward.1} parent=47 // loop_pre_header
                _
              $region57: #{edge_passing_forward.1} parent=47 // loop_header
                %s620 = sphi 0, %s622
                %p621 = scmp.ge.s32.totalorder %s620, %s613
                %s625 = sphi 0, %s632
                %s626 = sphi %s616, %s635
                %s627 = sphi %s618, %s636
              $region58: #{edge_passing_forward.1} parent=47 // loop_header_branch
                %624 = sbr.rel (%p621) target = $region62
              $region59: #{edge_passing_forward.1} parent=47 // loop_body
                %v628 = vld [vmem:[%s626] sm:%s530]
                %629 = vst [vmem:[%s627] sm:%s530] %v628
                %s630 = sadd.s32 1, %s625
                %p631 = scmp.ge.s32.totalorder %s630, %s613
                %s632 = scalar_select %p631, 0, %s630
                %s633 = smul.u32 %s632, 8
                %s634 = smul.u32 %s632, 8
                %s635 = scalar_lea.vmem %s616, %s633 [#allocation2]
                %s636 = scalar_lea.vmem %s618, %s634
              $region60: #{edge_passing_forward.1} parent=47 // loop_footer
                %s622 = sadd.s32 %s620, 1
              $region61: #{edge_passing_forward.1} parent=47 // loop_footer_branch
                %619 = sbr.rel target = $region57
              $region62: #{edge_passing_forward.1} parent=47 // loop_exit
                _
            $region48: #{edge_passing_forward.1} parent=39 // pred_fallthru
              _
          $region40: #{edge_passing_forward.1} parent=35 // pred_fallthru
            _
          %747 = vnop
        $region36: #{edge_passing_forward.1} parent=31 // pred_fallthru
          _
      $region32: #{edge_passing_forward.1} parent=5 // pred_fallthru
        _
      %p748 = scmp.le.s32.totalorder 2, %s9
      // Predicated region
      $region85: #{edge_passing_forward.1} parent=5 // pred_check
        %p749 = pneg %p748
      $region86: #{edge_passing_forward.1} parent=5 // pred_check_branch
        %751 = sbr.rel (%p749) target = $region88
      $region87: #{edge_passing_forward.1} parent=5 // pred_region
        %s752 = ssub.s32 %s9, 2
        // Predicated region
        $region89: #{edge_passing_forward.1} parent=87 // pred_check
          %p753 = pneg %p106
        $region90: #{edge_passing_forward.1} parent=87 // pred_check_branch
          %755 = sbr.rel (%p753) target = $region92
        $region91: #{edge_passing_forward.1} parent=87 // pred_region
          %s756 = sand.u32 %s91, 1
          %s757 = sand.u32 %s91, 1
          %s758 = smul.addr %s757, 256
          %s759 = scalar_lea.vmem [#allocation2], %s758
        $region92: #{edge_passing_forward.1} parent=87 // pred_fallthru
          _
      $region88: #{edge_passing_forward.1} parent=5 // pred_fallthru
        _
    $region6: #{edge_passing_forward.1} parent=1 // loop_footer
      %s13 = sadd.s32 1, %s9
    $region7: #{edge_passing_forward.1} parent=1 // loop_footer_branch
      %8 = sbr.rel target = $region3
    $region8: #{edge_passing_forward.1} parent=1 // loop_exit
      _

</llo_original>
